<compile_context>
chip_gen: v7x
topology: tpu7x:2x2x1
jax: 0.10.0
libtpu: 0.0.40
codegen_flags: <defaults>
</compile_context>

<pallas_src>
import functools

import jax
import jax.numpy as jnp
from jax.experimental import pallas as pl
from jax.experimental.pallas import tpu as pltpu


def _gate_kernel(x_ref, w1_ref, w2_ref,
                 scores_ref, idx_ref, imp_ref, load_ref,
                 *, num_selects, total_rows):
    # x_ref:   (T, H)  tile of tokens (native dtype)
    # w1_ref:  (E, H)  resident gate weight (torch layout, Linear #1)
    # w2_ref:  (E, E)  resident gate weight (torch layout, Linear #2)
    # scores_ref: (K, T)  top-k scores (lane-dense, caller dtype)
    # idx_ref:    (K, T)  top-k expert indices (int32)
    # imp_ref:    (1, E, 1) per-tile importance partial sum
    # load_ref:   (1, E, 1) per-tile load partial sum
    T = x_ref.shape[0]
    E = w1_ref.shape[0]
    K = num_selects

    x = x_ref[...]                       # (T, H), no upcast before the MXU
    w1t = w1_ref[...]                    # (E, H)
    w2t = w2_ref[...]                    # (E, E)

    # h^T = tanh(W1^T x^T): contract H (minor dim of both operands -> MXU NT
    # matmul, same pattern as q @ k.T). Output is already token-on-lanes.
    ht = jnp.tanh(jax.lax.dot_general(
        w1t, x, dimension_numbers=(((1,), (1,)), ((), ())),
        preferred_element_type=jnp.float32))                    # (E, T) f32
    # logits^T = W2^T h^T
    lt = jnp.dot(w2t, ht, preferred_element_type=jnp.float32)   # (E, T) f32

    expert_ids = jax.lax.broadcasted_iota(jnp.int32, (E, T), 0)

    # Iterative top-k over the (small) expert/sublane axis; K is tiny.
    work = lt
    vals, idxs = [], []
    for _ in range(K):
        m = jnp.max(work, axis=0, keepdims=True)                        # (1, T)
        # lowest index among ties (matches torch.topk / lax.top_k)
        idx = jnp.min(jnp.where(work == m, expert_ids, E),
                      axis=0, keepdims=True)                            # (1, T)
        vals.append(m)
        idxs.append(idx)
        work = jnp.where(expert_ids == idx, -jnp.inf, work)

    # Softmax over the K selected logits (vals[0] is the per-token max).
    mmax = vals[0]
    exps = [jnp.exp(v - mmax) for v in vals]
    denom = exps[0]
    for e in exps[1:]:
        denom = denom + e
    inv = pl.reciprocal(denom, approx=False)
    scs = [e * inv for e in exps]                                       # (1, T) each

    # Assemble lane-dense (K, T) outputs with broadcasting selects.
    kiota = jax.lax.broadcasted_iota(jnp.int32, (K, T), 0)
    scores_t = jnp.zeros((K, T), jnp.float32)
    idx_t = jnp.zeros((K, T), jnp.int32)
    for k in range(K):
        scores_t = jnp.where(kiota == k, scs[k], scores_t)
        idx_t = jnp.where(kiota == k, idxs[k], idx_t)
    scores_ref[...] = scores_t.astype(scores_ref.dtype)
    idx_ref[...] = idx_t

    # Dense scatter onto the expert axis, kept entirely in VMEM: (E, T).
    filt = jnp.zeros((E, T), jnp.float32)
    for k in range(K):
        filt = filt + jnp.where(expert_ids == idxs[k], scs[k], 0.0)

    # Mask the padded tail tokens of the last grid block (their x rows are
    # undefined VMEM data) before reducing to importance / load partials.
    lane_pos = jax.lax.broadcasted_iota(jnp.int32, (1, T), 1)
    remaining = total_rows - pl.program_id(0) * T
    valid = lane_pos < remaining                                        # (1, T)
    filt = jnp.where(valid, filt, 0.0)

    # Note: `load` counts scores_filtered > 0 strictly (a selected expert whose
    # softmax score underflows to exactly 0 is not counted), matching torch.
    imp_ref[...] = jnp.sum(filt, axis=1, keepdims=True)[None]           # (1, E, 1)
    load_ref[...] = jnp.sum((filt > 0).astype(jnp.float32),
                            axis=1, keepdims=True)[None]                # (1, E, 1)


def _cv_squared(v, eps=1e-10):
    """torch: x.var() / (x.mean()**2 + eps), unbiased variance."""
    if v.shape[0] == 1:
        return jnp.float32(0.0)
    v = v.astype(jnp.float32)
    mean = jnp.mean(v)
    var = jnp.var(v, ddof=1)
    return var / (mean * mean + eps)


def _pick_row_tile(rows, hidden, itemsize, budget_bytes=2 * 1024 * 1024,
                   max_tile=4096, min_grid_steps=8):
    """Row tile from a lane-padding-aware VMEM budget, keeping grid >= a few steps."""
    padded_row_bytes = max(hidden, 128) * itemsize      # VMEM pads lanes to 128
    rt = budget_bytes // padded_row_bytes
    rt = min(rt, max_tile)
    # Several grid steps so v7x's 2 TensorCores each get pipelined iterations.
    rt = min(rt, -(-rows // min_grid_steps))
    rt = max(rt, 128)
    rt = (rt // 128) * 128                               # tokens live on lanes
    return max(rt, 128)


def topk_balanced_noisy_gate(x, gate_w1, gate_w2, *, num_selects,
                             use_balance=True, balance_loss_weight=0.01,
                             row_tile=None):
    """Eval-mode forward of TopKBalancedNoisyGate.

    x:        (..., H) tokens
    gate_w1:  (H, E)  == gate_network[0].weight.T
    gate_w2:  (E, E)  == gate_network[2].weight.T
    Returns dict(topK_indices, topK_scores, balance_loss, load, importance).
    """
    orig_dtype = x.dtype
    H = x.shape[-1]
    orig_lead = x.shape[:-1]
    x2 = x.reshape(-1, H)
    rows = x2.shape[0]
    E = gate_w1.shape[1]
    K = num_selects
    assert gate_w1.shape == (H, E) and gate_w2.shape == (E, E)
    assert K <= E

    # Weights enter the kernel pre-transposed (torch layout): tiny one-time op.
    w1t = gate_w1.T        # (E, H)
    w2t = gate_w2.T        # (E, E)

    if row_tile is None:
        row_tile = _pick_row_tile(rows, H, x2.dtype.itemsize)
    if row_tile >= rows:
        row_tile = rows            # single full block (block dims == array dims)
    else:
        row_tile = max(128, (row_tile // 128) * 128)
    num_tiles = pl.cdiv(rows, row_tile)
    grid = (num_tiles,)

    kernel = functools.partial(_gate_kernel, num_selects=K, total_rows=rows)

    out_shapes = (
        jax.ShapeDtypeStruct((K, rows), orig_dtype),        # topK scores (transposed)
        jax.ShapeDtypeStruct((K, rows), jnp.int32),         # topK indices (transposed)
        jax.ShapeDtypeStruct((num_tiles, E, 1), jnp.float32),  # importance partials
        jax.ShapeDtypeStruct((num_tiles, E, 1), jnp.float32),  # load partials
    )

    itemsize = x2.dtype.itemsize
    cost = pl.CostEstimate(
        flops=2 * rows * H * E + 2 * rows * E * E + 8 * rows * E * K,
        transcendentals=rows * (E + K),
        bytes_accessed=(rows * H * itemsize
                        + (E * H + E * E) * gate_w1.dtype.itemsize
                        + rows * K * (itemsize + 4)
                        + num_tiles * E * 8),
    )

    scores_t, idx_t, imp_p, load_p = pl.pallas_call(
        kernel,
        out_shape=out_shapes,
        grid_spec=pltpu.PrefetchScalarGridSpec(
            num_scalar_prefetch=0,
            grid=grid,
            in_specs=[
                pl.BlockSpec((row_tile, H), lambda i: (i, 0)),
                pl.BlockSpec((E, H), lambda i: (0, 0)),   # resident weight
                pl.BlockSpec((E, E), lambda i: (0, 0)),   # resident weight
            ],
            out_specs=[
                pl.BlockSpec((K, row_tile), lambda i: (0, i)),
                pl.BlockSpec((K, row_tile), lambda i: (0, i)),
                pl.BlockSpec((1, E, 1), lambda i: (i, 0, 0)),
                pl.BlockSpec((1, E, 1), lambda i: (i, 0, 0)),
            ],
        ),
        compiler_params=pltpu.CompilerParams(
            dimension_semantics=("parallel",),   # rows shard across v7x's 2 TCs
        ),
        cost_estimate=cost,
    )(x2, w1t, w2t)

    # Tiny epilogue in plain JAX: transpose (K, rows) -> (rows, K) and reduce
    # the per-tile (num_tiles, E) partial sums.
    topk_scores = scores_t.T.reshape(orig_lead + (K,))
    topk_idx = idx_t.T.reshape(orig_lead + (K,))
    importance = jnp.sum(imp_p[:, :, 0], axis=0)
    load = jnp.sum(load_p[:, :, 0], axis=0)

    if use_balance:
        balance_loss = balance_loss_weight * (_cv_squared(importance) + _cv_squared(load))
    else:
        balance_loss = jnp.float32(-100.0)   # matches torch forward() sentinel

    return {
        "topK_indices": topk_idx,
        "topK_scores": topk_scores,
        "balance_loss": balance_loss,
        "load": load,
        "importance": importance,
    }


if __name__ == "__main__":
    # Module config (small, consistent with the forward): H=32 hidden,
    # 8 experts, top-2 selection, 2*8 = 16 tokens.
    hidden_size = 32
    num_experts = 8
    num_selects = 2
    batch, seq = 2, 8
    tokens = batch * seq

    key = jax.random.PRNGKey(0)
    kx, k1, k2, kx2 = jax.random.split(key, 4)
    x = jax.random.normal(kx, (tokens, hidden_size), dtype=jnp.float32)
    # gate_network = 'mlp': Linear(H,E,bias=False) -> Tanh -> Linear(E,E,bias=False)
    gate_w1 = jax.random.normal(k1, (hidden_size, num_experts), dtype=jnp.float32) * 0.5
    gate_w2 = jax.random.normal(k2, (num_experts, num_experts), dtype=jnp.float32) * 0.5

    # --- pure-JAX reference (eval-mode forward semantics) ---
    def reference(xr, w1, w2, k, w=0.01):
        hp = jax.lax.Precision.HIGHEST
        logits = jnp.dot(jnp.tanh(jnp.dot(xr, w1, precision=hp)), w2, precision=hp)
        vals, idx = jax.lax.top_k(logits, k)
        scores = jax.nn.softmax(vals.astype(jnp.float32), axis=1)
        filt = jnp.zeros(logits.shape, jnp.float32)
        filt = filt.at[jnp.arange(xr.shape[0])[:, None], idx].set(scores)
        imp = filt.sum(0)
        load = (filt > 0).sum(0).astype(jnp.float32)
        bal = w * (_cv_squared(imp) + _cv_squared(load))
        return idx, scores, imp, load, bal

    def check(out, ref, name):
        ref_idx, ref_scores, ref_imp, ref_load, ref_bal = ref
        assert out["topK_indices"].shape == ref_idx.shape
        assert out["topK_scores"].shape == ref_scores.shape
        assert jnp.array_equal(out["topK_indices"], ref_idx), f"{name}: topK_indices mismatch"
        assert jnp.allclose(out["topK_scores"], ref_scores, atol=1e-4), f"{name}: topK_scores mismatch"
        assert jnp.allclose(out["importance"], ref_imp, atol=1e-4), f"{name}: importance mismatch"
        assert jnp.allclose(out["load"], ref_load, atol=1e-4), f"{name}: load mismatch"
        assert jnp.allclose(out["balance_loss"], ref_bal, rtol=1e-3, atol=1e-4), f"{name}: balance_loss mismatch"

    out = topk_balanced_noisy_gate(x, gate_w1, gate_w2, num_selects=num_selects)
    jax.block_until_ready(out)
    check(out, reference(x, gate_w1, gate_w2, num_selects), "small")

    # Ragged multi-tile case: exercises grid > 1 and the masked partial tail block.
    rows2 = 300
    x_big = jax.random.normal(kx2, (rows2, hidden_size), dtype=jnp.float32)
    out2 = topk_balanced_noisy_gate(x_big, gate_w1, gate_w2,
                                    num_selects=num_selects, row_tile=128)
    jax.block_until_ready(out2)
    check(out2, reference(x_big, gate_w1, gate_w2, num_selects), "ragged")

    print("KERNEL_OK")
</pallas_src>

<mosaic_0001>
module attributes {stable_mosaic.version = 11 : i64} {
  func.func @_gate_kernel(%arg0: i32, %arg1: memref<16x32xf32, #tpu.memory_space<vmem>>, %arg2: memref<8x32xf32, #tpu.memory_space<vmem>>, %arg3: memref<8x8xf32, #tpu.memory_space<vmem>>, %arg4: memref<2x16xf32, #tpu.memory_space<vmem>>, %arg5: memref<2x16xi32, #tpu.memory_space<vmem>>, %arg6: memref<1x8x1xf32, #tpu.memory_space<vmem>>, %arg7: memref<1x8x1xf32, #tpu.memory_space<vmem>>) attributes {dimension_semantics = [#tpu.dimension_semantics<parallel>], iteration_bounds = array<i64: 1>, scalar_prefetch = 0 : i64, scratch_operands = 0 : i64, tpu.core_type = #tpu.core_type<tc>, window_params = [{transform_indices = @transform_0, window_bounds = array<i64: 16, 32>}, {pipeline_mode = #tpu.pipeline_mode<synchronous>, transform_indices = @transform_1, window_bounds = array<i64: 8, 32>}, {pipeline_mode = #tpu.pipeline_mode<synchronous>, transform_indices = @transform_2, window_bounds = array<i64: 8, 8>}, {transform_indices = @transform_3, window_bounds = array<i64: 2, 16>}, {transform_indices = @transform_4, window_bounds = array<i64: 2, 16>}, {transform_indices = @transform_5, window_bounds = array<i64: 1, 8, 1>}, {transform_indices = @transform_6, window_bounds = array<i64: 1, 8, 1>}]} {
    %c0 = arith.constant 0 : index
    %c0_0 = arith.constant 0 : index
    %0 = vector.load %arg1[%c0, %c0_0] : memref<16x32xf32, #tpu.memory_space<vmem>>, vector<16x32xf32>
    %c0_1 = arith.constant 0 : index
    %c0_2 = arith.constant 0 : index
    %1 = vector.load %arg2[%c0_1, %c0_2] : memref<8x32xf32, #tpu.memory_space<vmem>>, vector<8x32xf32>
    %c0_3 = arith.constant 0 : index
    %c0_4 = arith.constant 0 : index
    %2 = vector.load %arg3[%c0_3, %c0_4] : memref<8x8xf32, #tpu.memory_space<vmem>>, vector<8x8xf32>
    %cst = arith.constant dense<0.000000e+00> : vector<8x16xf32>
    %3 = tpu.matmul %1, %0, %cst {dimension_numbers = #tpu.dot_dimension_numbers<[1], [1], [0], [0], [0, 0, 1, 0], [], []>} : vector<8x32xf32>, vector<16x32xf32>, vector<8x16xf32> -> vector<8x16xf32>
    %4 = math.tanh %3 : vector<8x16xf32>
    %cst_5 = arith.constant dense<0.000000e+00> : vector<8x16xf32>
    %5 = tpu.matmul %2, %4, %cst_5 {dimension_numbers = #tpu.dot_dimension_numbers<[1], [0], [0], [1], [0, 0, 1, 1], [], []>} : vector<8x8xf32>, vector<8x16xf32>, vector<8x16xf32> -> vector<8x16xf32>
    %6 = tpu.iota {dimensions = array<i32: 0>} : vector<8x16xi32>
    %cst_6 = arith.constant dense<0xFF800000> : vector<16xf32>
    %7 = vector.multi_reduction <maximumf>, %5, %cst_6 [0] : vector<8x16xf32> to vector<16xf32>
    %8 = vector.shape_cast %7 : vector<16xf32> to vector<1x16xf32>
    %9 = vector.broadcast %8 : vector<1x16xf32> to vector<8x16xf32>
    %10 = arith.cmpf oeq, %5, %9 : vector<8x16xf32>
    %c8_i32 = arith.constant 8 : i32
    %11 = vector.broadcast %c8_i32 : i32 to vector<8x16xi32>
    %12 = arith.select %10, %6, %11 : vector<8x16xi1>, vector<8x16xi32>
    %cst_7 = arith.constant dense<2147483647> : vector<16xi32>
    %13 = vector.multi_reduction <minsi>, %12, %cst_7 [0] : vector<8x16xi32> to vector<16xi32>
    %14 = vector.shape_cast %13 : vector<16xi32> to vector<1x16xi32>
    %15 = vector.broadcast %14 : vector<1x16xi32> to vector<8x16xi32>
    %16 = arith.cmpi eq, %6, %15 : vector<8x16xi32>
    %cst_8 = arith.constant 0xFF800000 : f32
    %17 = vector.broadcast %cst_8 : f32 to vector<8x16xf32>
    %18 = arith.select %16, %17, %5 : vector<8x16xi1>, vector<8x16xf32>
    %cst_9 = arith.constant dense<0xFF800000> : vector<16xf32>
    %19 = vector.multi_reduction <maximumf>, %18, %cst_9 [0] : vector<8x16xf32> to vector<16xf32>
    %20 = vector.shape_cast %19 : vector<16xf32> to vector<1x16xf32>
    %21 = vector.broadcast %20 : vector<1x16xf32> to vector<8x16xf32>
    %22 = arith.cmpf oeq, %18, %21 : vector<8x16xf32>
    %c8_i32_10 = arith.constant 8 : i32
    %23 = vector.broadcast %c8_i32_10 : i32 to vector<8x16xi32>
    %24 = arith.select %22, %6, %23 : vector<8x16xi1>, vector<8x16xi32>
    %cst_11 = arith.constant dense<2147483647> : vector<16xi32>
    %25 = vector.multi_reduction <minsi>, %24, %cst_11 [0] : vector<8x16xi32> to vector<16xi32>
    %26 = vector.shape_cast %25 : vector<16xi32> to vector<1x16xi32>
    %27 = arith.subf %8, %8 : vector<1x16xf32>
    %28 = math.exp %27 : vector<1x16xf32>
    %29 = arith.subf %20, %8 : vector<1x16xf32>
    %30 = math.exp %29 : vector<1x16xf32>
    %31 = arith.addf %28, %30 : vector<1x16xf32>
    %32 = tpu.reciprocal %31 : vector<1x16xf32> -> vector<1x16xf32>
    %33 = arith.mulf %28, %32 : vector<1x16xf32>
    %34 = arith.mulf %30, %32 : vector<1x16xf32>
    %35 = tpu.iota {dimensions = array<i32: 0>} : vector<2x16xi32>
    %cst_12 = arith.constant 0.000000e+00 : f32
    %36 = vector.broadcast %cst_12 : f32 to vector<2x16xf32>
    %c0_i32 = arith.constant 0 : i32
    %37 = vector.broadcast %c0_i32 : i32 to vector<2x16xi32>
    %c0_i32_13 = arith.constant 0 : i32
    %38 = vector.broadcast %c0_i32_13 : i32 to vector<2x16xi32>
    %39 = arith.cmpi eq, %35, %38 : vector<2x16xi32>
    %40 = vector.shape_cast %33 : vector<1x16xf32> to vector<1x16xf32>
    %41 = vector.broadcast %40 : vector<1x16xf32> to vector<2x16xf32>
    %42 = arith.select %39, %41, %36 : vector<2x16xi1>, vector<2x16xf32>
    %c0_i32_14 = arith.constant 0 : i32
    %43 = vector.broadcast %c0_i32_14 : i32 to vector<2x16xi32>
    %44 = arith.cmpi eq, %35, %43 : vector<2x16xi32>
    %45 = vector.shape_cast %14 : vector<1x16xi32> to vector<1x16xi32>
    %46 = vector.broadcast %45 : vector<1x16xi32> to vector<2x16xi32>
    %47 = arith.select %44, %46, %37 : vector<2x16xi1>, vector<2x16xi32>
    %c1_i32 = arith.constant 1 : i32
    %48 = vector.broadcast %c1_i32 : i32 to vector<2x16xi32>
    %49 = arith.cmpi eq, %35, %48 : vector<2x16xi32>
    %50 = vector.shape_cast %34 : vector<1x16xf32> to vector<1x16xf32>
    %51 = vector.broadcast %50 : vector<1x16xf32> to vector<2x16xf32>
    %52 = arith.select %49, %51, %42 : vector<2x16xi1>, vector<2x16xf32>
    %c1_i32_15 = arith.constant 1 : i32
    %53 = vector.broadcast %c1_i32_15 : i32 to vector<2x16xi32>
    %54 = arith.cmpi eq, %35, %53 : vector<2x16xi32>
    %55 = vector.shape_cast %26 : vector<1x16xi32> to vector<1x16xi32>
    %56 = vector.broadcast %55 : vector<1x16xi32> to vector<2x16xi32>
    %57 = arith.select %54, %56, %47 : vector<2x16xi1>, vector<2x16xi32>
    %c0_16 = arith.constant 0 : index
    %c0_17 = arith.constant 0 : index
    %58 = vector.load %arg4[%c0_16, %c0_17] : memref<2x16xf32, #tpu.memory_space<vmem>>, vector<2x16xf32>
    tpu.vector_store %arg4[%c0_16, %c0_17], %52 {strides = array<i32>} : memref<2x16xf32, #tpu.memory_space<vmem>>, vector<2x16xf32>,
    %c0_18 = arith.constant 0 : index
    %c0_19 = arith.constant 0 : index
    %59 = vector.load %arg5[%c0_18, %c0_19] : memref<2x16xi32, #tpu.memory_space<vmem>>, vector<2x16xi32>
    tpu.vector_store %arg5[%c0_18, %c0_19], %57 {strides = array<i32>} : memref<2x16xi32, #tpu.memory_space<vmem>>, vector<2x16xi32>,
    %cst_20 = arith.constant 0.000000e+00 : f32
    %60 = vector.broadcast %cst_20 : f32 to vector<8x16xf32>
    %61 = vector.broadcast %14 : vector<1x16xi32> to vector<8x16xi32>
    %62 = arith.cmpi eq, %6, %61 : vector<8x16xi32>
    %cst_21 = arith.constant 0.000000e+00 : f32
    %63 = vector.shape_cast %33 : vector<1x16xf32> to vector<1x16xf32>
    %64 = vector.broadcast %63 : vector<1x16xf32> to vector<8x16xf32>
    %65 = vector.broadcast %cst_21 : f32 to vector<8x16xf32>
    %66 = arith.select %62, %64, %65 : vector<8x16xi1>, vector<8x16xf32>
    %67 = arith.addf %60, %66 : vector<8x16xf32>
    %68 = vector.broadcast %26 : vector<1x16xi32> to vector<8x16xi32>
    %69 = arith.cmpi eq, %6, %68 : vector<8x16xi32>
    %cst_22 = arith.constant 0.000000e+00 : f32
    %70 = vector.shape_cast %34 : vector<1x16xf32> to vector<1x16xf32>
    %71 = vector.broadcast %70 : vector<1x16xf32> to vector<8x16xf32>
    %72 = vector.broadcast %cst_22 : f32 to vector<8x16xf32>
    %73 = arith.select %69, %71, %72 : vector<8x16xi1>, vector<8x16xf32>
    %74 = arith.addf %67, %73 : vector<8x16xf32>
    %75 = tpu.iota {dimensions = array<i32: 1>} : vector<1x16xi32>
    %c16_i32 = arith.constant 16 : i32
    %76 = arith.muli %arg0, %c16_i32 : i32
    %c16_i32_23 = arith.constant 16 : i32
    %77 = arith.subi %c16_i32_23, %76 : i32
    %78 = vector.broadcast %77 : i32 to vector<1x16xi32>
    %79 = arith.cmpi slt, %75, %78 : vector<1x16xi32>
    %cst_24 = arith.constant 0.000000e+00 : f32
    %80 = vector.shape_cast %79 : vector<1x16xi1> to vector<1x16xi1>
    %81 = vector.broadcast %80 : vector<1x16xi1> to vector<8x16xi1>
    %82 = vector.broadcast %cst_24 : f32 to vector<8x16xf32>
    %83 = arith.select %81, %74, %82 : vector<8x16xi1>, vector<8x16xf32>
    %cst_25 = arith.constant dense<0.000000e+00> : vector<8xf32>
    %84 = vector.multi_reduction <add>, %83, %cst_25 [1] : vector<8x16xf32> to vector<8xf32>
    %85 = vector.shape_cast %84 : vector<8xf32> to vector<8x1xf32>
    %86 = vector.shape_cast %85 : vector<8x1xf32> to vector<1x8x1xf32>
    %c0_26 = arith.constant 0 : index
    %c0_27 = arith.constant 0 : index
    %c0_28 = arith.constant 0 : index
    %87 = vector.load %arg6[%c0_26, %c0_27, %c0_28] : memref<1x8x1xf32, #tpu.memory_space<vmem>>, vector<1x8x1xf32>
    tpu.vector_store %arg6[%c0_26, %c0_27, %c0_28], %86 {strides = array<i32>} : memref<1x8x1xf32, #tpu.memory_space<vmem>>, vector<1x8x1xf32>,
    %cst_29 = arith.constant 0.000000e+00 : f32
    %88 = vector.broadcast %cst_29 : f32 to vector<8x16xf32>
    %89 = arith.cmpf ogt, %83, %88 : vector<8x16xf32>
    %90 = arith.extui %89 : vector<8x16xi1> to vector<8x16xi32>
    %91 = arith.sitofp %90 : vector<8x16xi32> to vector<8x16xf32>
    %cst_30 = arith.constant dense<0.000000e+00> : vector<8xf32>
    %92 = vector.multi_reduction <add>, %91, %cst_30 [1] : vector<8x16xf32> to vector<8xf32>
    %93 = vector.shape_cast %92 : vector<8xf32> to vector<8x1xf32>
    %94 = vector.shape_cast %93 : vector<8x1xf32> to vector<1x8x1xf32>
    %c0_31 = arith.constant 0 : index
    %c0_32 = arith.constant 0 : index
    %c0_33 = arith.constant 0 : index
    %95 = vector.load %arg7[%c0_31, %c0_32, %c0_33] : memref<1x8x1xf32, #tpu.memory_space<vmem>>, vector<1x8x1xf32>
    tpu.vector_store %arg7[%c0_31, %c0_32, %c0_33], %94 {strides = array<i32>} : memref<1x8x1xf32, #tpu.memory_space<vmem>>, vector<1x8x1xf32>,
    return
  }
  func.func @transform_0(%arg0: i32) -> (i32, i32) {
    %c0_i32 = arith.constant 0 : i32
    %c0_i32_0 = arith.constant 0 : i32
    return %arg0, %c0_i32 : i32, i32
  }
  func.func @transform_1(%arg0: i32) -> (i32, i32) {
    %c0_i32 = arith.constant 0 : i32
    %c0_i32_0 = arith.constant 0 : i32
    %c0_i32_1 = arith.constant 0 : i32
    return %c0_i32, %c0_i32_0 : i32, i32
  }
  func.func @transform_2(%arg0: i32) -> (i32, i32) {
    %c0_i32 = arith.constant 0 : i32
    %c0_i32_0 = arith.constant 0 : i32
    %c0_i32_1 = arith.constant 0 : i32
    return %c0_i32, %c0_i32_0 : i32, i32
  }
  func.func @transform_3(%arg0: i32) -> (i32, i32) {
    %c0_i32 = arith.constant 0 : i32
    %c0_i32_0 = arith.constant 0 : i32
    return %c0_i32, %arg0 : i32, i32
  }
  func.func @transform_4(%arg0: i32) -> (i32, i32) {
    %c0_i32 = arith.constant 0 : i32
    %c0_i32_0 = arith.constant 0 : i32
    return %c0_i32, %arg0 : i32, i32
  }
  func.func @transform_5(%arg0: i32) -> (i32, i32, i32) {
    %c0_i32 = arith.constant 0 : i32
    %c0_i32_0 = arith.constant 0 : i32
    %c0_i32_1 = arith.constant 0 : i32
    return %arg0, %c0_i32, %c0_i32_0 : i32, i32, i32
  }
  func.func @transform_6(%arg0: i32) -> (i32, i32, i32) {
    %c0_i32 = arith.constant 0 : i32
    %c0_i32_0 = arith.constant 0 : i32
    %c0_i32_1 = arith.constant 0 : i32
    return %arg0, %c0_i32, %c0_i32_0 : i32, i32, i32
  }
}

</mosaic_0001>

<llo_original>
// kernel: tpu_custom_call.1
$region0: #{tpu_custom_call.1}
  #allocation0 [shape = 'u32[]', space=smem, size = 0x4, offset = 0x4, fixed_abs, tag = 'smem constant byte address 0x4 - core index']
  #allocation1 [shape = 'u32[144,128]{1,0:T(1,128)}', space=vmem, size = 0x12000, scoped, tag = 'internal scratch']
  %s0 = inlined_call_operand.hbm [shape: f32[16,32], index: 0, kind: input, shape index: {}]
  %s1 = inlined_call_operand.hbm [shape: f32[8,32], index: 1, kind: input, shape index: {}]
  %s2 = inlined_call_operand.hbm [shape: f32[8,8], index: 2, kind: input, shape index: {}]
  %s3 = inlined_call_operand.hbm [shape: f32[2,16], index: 3, kind: output, shape index: {0}]
  %s4 = inlined_call_operand.hbm [shape: s32[2,16], index: 4, kind: output, shape index: {1}]
  %s5 = inlined_call_operand.vmem [shape: f32[1,8,1], index: 5, kind: output, shape index: {2}]
  %s6 = inlined_call_operand.vmem [shape: f32[1,8,1], index: 6, kind: output, shape index: {3}]
  %7 = xla_tuple %s3, %s4, %s5, %s6
  %s8 = sld [smem:[#allocation0]]
  $region58: #{tpu_custom_call.1} parent=0
    _
  %s10 = ssub.s32 1, %s8
  %s11 = scalar_select 0, %s10, %s8
  $region1: #{tpu_custom_call.1} parent=0
    #allocation2 [shape = 'u8[8192]{0}', space=vmem, size = 0x2000, scoped, tag = 'input window, operand 0, single buffered']
    #allocation3 [shape = 's32[1]{0}', space=sflag, size = 0x4, scoped, tag = 'scoped memory for tpu_custom_call.1']
    #allocation4 [shape = 's32[1]{0}', space=sflag, size = 0x4, scoped, tag = 'scoped memory for tpu_custom_call.1']
    #allocation5 [shape = 'u8[4096]{0}', space=vmem, size = 0x1000, scoped, tag = 'input window, operand 1, single buffered']
    #allocation6 [shape = 's32[1]{0}', space=sflag, size = 0x4, scoped, tag = 'scoped memory for tpu_custom_call.1']
    #allocation7 [shape = 'u8[4096]{0}', space=vmem, size = 0x1000, scoped, tag = 'input window, operand 2, single buffered']
    #allocation8 [shape = 'u8[1024]{0}', space=vmem, size = 0x400, scoped, tag = 'output window, operand 0, single buffered']
    #allocation9 [shape = 'u8[1024]{0}', space=vmem, size = 0x400, scoped, tag = 'output window, operand 1, single buffered']
    #allocation10 [shape = 's32[1]{0}', space=sflag, size = 0x4, scoped, tag = 'scoped memory for tpu_custom_call.1']
    %12 = vsyncpa [#allocation3], 0
    %13 = vsyncpa [#allocation6], 0
    %14 = vsyncpa [#allocation4], 0
    %15 = vsyncpa [#allocation10], 0
    // Predicated region
    $region2: #{tpu_custom_call.1} parent=1 // pred_check
      _
    $region3: #{tpu_custom_call.1} parent=1 // pred_check_branch
      %17 = sbr.rel (0) target = $region5
    $region4: #{tpu_custom_call.1} parent=1 // pred_region
      %s19 = ssub.s32 256, 256
      %20 = vsyncadd [#allocation3], %s19
      %s21 = sshll.u32 [#allocation2], 4
      %s22 = int_to_ptr.vmem [resolvable:$true] %s21
      %27 = dma.hbm_to_vmem [thread:$0]  %s0, 256, %s22, [#allocation3], 128, 128, 8
    $region5: #{tpu_custom_call.1} parent=1 // pred_fallthru
      _
    // Predicated region
    $region6: #{tpu_custom_call.1} parent=1 // pred_check
      _
    $region7: #{tpu_custom_call.1} parent=1 // pred_check_branch
      %29 = sbr.rel (0) target = $region9
    $region8: #{tpu_custom_call.1} parent=1 // pred_region
      %s31 = ssub.s32 128, 128
      %32 = vsyncadd [#allocation6], %s31
      %s34 = sshll.u32 [#allocation5], 4
      %s35 = int_to_ptr.vmem [resolvable:$true] %s34
      %37 = dma.hbm_to_vmem [thread:$0]  %s1, 128, %s35, [#allocation6]
    $region9: #{tpu_custom_call.1} parent=1 // pred_fallthru
      _
    // Predicated region
    $region10: #{tpu_custom_call.1} parent=1 // pred_check
      _
    $region11: #{tpu_custom_call.1} parent=1 // pred_check_branch
      %39 = sbr.rel (0) target = $region13
    $region12: #{tpu_custom_call.1} parent=1 // pred_region
      %s41 = ssub.s32 128, 128
      %42 = vsyncadd [#allocation6], %s41
      %s44 = sshll.u32 [#allocation7], 4
      %s45 = int_to_ptr.vmem [resolvable:$true] %s44
      %47 = dma.hbm_to_vmem [thread:$0]  %s2, 128, %s45, [#allocation6]
    $region13: #{tpu_custom_call.1} parent=1 // pred_fallthru
      _
    // Predicated region
    $region14: #{tpu_custom_call.1} parent=1 // pred_check
      _
    $region15: #{tpu_custom_call.1} parent=1 // pred_check_branch
      %49 = sbr.rel (0) target = $region17
    $region16: #{tpu_custom_call.1} parent=1 // pred_region
      %50 = dma.done [#allocation3], 256
    $region17: #{tpu_custom_call.1} parent=1 // pred_fallthru
      _
    // Predicated region
    $region18: #{tpu_custom_call.1} parent=1 // pred_check
      _
    $region19: #{tpu_custom_call.1} parent=1 // pred_check_branch
      %52 = sbr.rel (0) target = $region21
    $region20: #{tpu_custom_call.1} parent=1 // pred_region
      %53 = dma.done [#allocation6], 128
    $region21: #{tpu_custom_call.1} parent=1 // pred_fallthru
      _
    // Predicated region
    $region22: #{tpu_custom_call.1} parent=1 // pred_check
      _
    $region23: #{tpu_custom_call.1} parent=1 // pred_check_branch
      %55 = sbr.rel (0) target = $region25
    $region24: #{tpu_custom_call.1} parent=1 // pred_region
      %56 = dma.done [#allocation6], 128
    $region25: #{tpu_custom_call.1} parent=1 // pred_fallthru
      _
    %v57 = vld [vmem:[#allocation2] sm:$0xff]
    %v58 = vld [vmem:[#allocation2 + $0x8] sm:$0xff]
    %v59 = vld [vmem:[#allocation5] sm:$0xff]
    %v60 = vld [vmem:[#allocation7] sm:$0xff]
    %vm61 = vcmask 261120
    %v63 = vsel %vm61, %v59, 0
    %v66 = vsel %vm61, %v57, 0
    %v69 = vsel %vm61, %v58, 0
    %71 = vmatprep.subr.mxu0 0.0
    %72 = vmatpush1.xpose.msra.mxu0 %v66
    %73 = vmatprep.subr.mxu0 0.0
    %74 = vmatpush1.xpose.msra.mxu0 %v69
    %75 = vmatprep.subr.mxu0 0.0
    %76 = vmatpush1.xpose.msra.mxu0 0.0
    %77 = vmatprep.subr.mxu0 0.0
    %78 = vmatpush1.xpose.msra.mxu0 0.0
    %79 = vmatprep.subr.mxu0 0.0
    %80 = vmatpush1.xpose.msra.mxu0 0.0
    %81 = vmatprep.subr.mxu0 0.0
    %82 = vmatpush1.xpose.msra.mxu0 0.0
    %83 = vmatprep.subr.mxu0 0.0
    %84 = vmatpush1.xpose.msra.mxu0 0.0
    %85 = vmatprep.subr.mxu0 0.0
    %86 = vmatpush1.xpose.msra.mxu0 0.0
    %87 = vmatprep.subr.mxu0 0.0
    %88 = vmatpush1.xpose.msra.mxu0 0.0
    %89 = vmatprep.subr.mxu0 0.0
    %90 = vmatpush1.xpose.msra.mxu0 0.0
    %91 = vmatprep.subr.mxu0 0.0
    %92 = vmatpush1.xpose.msra.mxu0 0.0
    %93 = vmatprep.subr.mxu0 0.0
    %94 = vmatpush1.xpose.msra.mxu0 0.0
    %95 = vmatprep.subr.mxu0 0.0
    %96 = vmatpush1.xpose.msra.mxu0 0.0
    %97 = vmatprep.subr.mxu0 0.0
    %98 = vmatpush1.xpose.msra.mxu0 0.0
    %99 = vmatprep.subr.mxu0 0.0
    %100 = vmatpush1.xpose.msra.mxu0 0.0
    %101 = vmatprep.subr.mxu0 0.0
    %102 = vmatpush1.xpose.msra.mxu0 0.0
    %103 = vmatprep.subr.mxu0 0.0
    %104 = vmatpush1.xpose.msra.mxu0 0.0
    %105 = vmatprep.subr.mxu0 0.0
    %106 = vmatpush1.xpose.msra.mxu0 0.0
    %107 = vmatprep.subr.mxu0 0.0
    %108 = vmatpush1.xpose.msra.mxu0 0.0
    %109 = vmatprep.subr.mxu0 0.0
    %110 = vmatpush1.xpose.msra.mxu0 0.0
    %111 = vmatprep.subr.mxu0 0.0
    %112 = vmatpush1.xpose.msra.mxu0 0.0
    %113 = vmatprep.subr.mxu0 0.0
    %114 = vmatpush1.xpose.msra.mxu0 0.0
    %115 = vmatprep.subr.mxu0 0.0
    %116 = vmatpush1.xpose.msra.mxu0 0.0
    %117 = vmatprep.subr.mxu0 0.0
    %118 = vmatpush1.xpose.msra.mxu0 0.0
    %119 = vmatprep.subr.mxu0 0.0
    %120 = vmatpush1.xpose.msra.mxu0 0.0
    %121 = vmatprep.subr.mxu0 0.0
    %122 = vmatpush1.xpose.msra.mxu0 0.0
    %123 = vmatprep.subr.mxu0 0.0
    %124 = vmatpush1.xpose.msra.mxu0 0.0
    %125 = vmatprep.subr.mxu0 0.0
    %126 = vmatpush1.xpose.msra.mxu0 0.0
    %127 = vmatprep.subr.mxu0 0.0
    %128 = vmatpush1.xpose.msra.mxu0 0.0
    %129 = vmatprep.subr.mxu0 0.0
    %130 = vmatpush1.xpose.msra.mxu0 0.0
    %131 = vmatprep.subr.mxu0 0.0
    %132 = vmatpush1.xpose.msra.mxu0 0.0
    %133 = vmatprep.subr.mxu0 0.0
    %134 = vmatpush1.xpose.msra.mxu0 0.0
    %135 = vmatprep.mubr.f32.mxu0 0.0
    %136 = vmatmul.mubr.f32.gmra.mrb[0].mxu0 %v63
    %v137 = vpop.f32.mrb[0].mxu0
    %v138 = vadd.f32 0.0, %v137
    %v139 = vpop.f32.mrb[0].mxu0
    %140 = vdwg.mxu0
    %v141 = vtanh.pop %v138
    %vm142 = vcmask 64512
    %v144 = vsel %vm142, %v60, 0
    %146 = vmatprep.subr.mxu0 0.0
    %147 = vmatpush1.msra.mxu0 %v141
    %148 = vmatprep.subr.mxu0 0.0
    %149 = vmatpush1.msra.mxu0 0.0
    %150 = vmatprep.subr.mxu0 0.0
    %151 = vmatpush1.msra.mxu0 0.0
    %152 = vmatprep.subr.mxu0 0.0
    %153 = vmatpush1.msra.mxu0 0.0
    %154 = vmatprep.subr.mxu0 0.0
    %155 = vmatpush1.msra.mxu0 0.0
    %156 = vmatprep.subr.mxu0 0.0
    %157 = vmatpush1.msra.mxu0 0.0
    %158 = vmatprep.subr.mxu0 0.0
    %159 = vmatpush1.msra.mxu0 0.0
    %160 = vmatprep.subr.mxu0 0.0
    %161 = vmatpush1.msra.mxu0 0.0
    %162 = vmatprep.subr.mxu0 0.0
    %163 = vmatpush1.msra.mxu0 0.0
    %164 = vmatprep.subr.mxu0 0.0
    %165 = vmatpush1.msra.mxu0 0.0
    %166 = vmatprep.subr.mxu0 0.0
    %167 = vmatpush1.msra.mxu0 0.0
    %168 = vmatprep.subr.mxu0 0.0
    %169 = vmatpush1.msra.mxu0 0.0
    %170 = vmatprep.subr.mxu0 0.0
    %171 = vmatpush1.msra.mxu0 0.0
    %172 = vmatprep.subr.mxu0 0.0
    %173 = vmatpush1.msra.mxu0 0.0
    %174 = vmatprep.subr.mxu0 0.0
    %175 = vmatpush1.msra.mxu0 0.0
    %176 = vmatprep.subr.mxu0 0.0
    %177 = vmatpush1.msra.mxu0 0.0
    %178 = vmatprep.subr.mxu0 0.0
    %179 = vmatpush1.msra.mxu0 0.0
    %180 = vmatprep.subr.mxu0 0.0
    %181 = vmatpush1.msra.mxu0 0.0
    %182 = vmatprep.subr.mxu0 0.0
    %183 = vmatpush1.msra.mxu0 0.0
    %184 = vmatprep.subr.mxu0 0.0
    %185 = vmatpush1.msra.mxu0 0.0
    %186 = vmatprep.subr.mxu0 0.0
    %187 = vmatpush1.msra.mxu0 0.0
    %188 = vmatprep.subr.mxu0 0.0
    %189 = vmatpush1.msra.mxu0 0.0
    %190 = vmatprep.subr.mxu0 0.0
    %191 = vmatpush1.msra.mxu0 0.0
    %192 = vmatprep.subr.mxu0 0.0
    %193 = vmatpush1.msra.mxu0 0.0
    %194 = vmatprep.subr.mxu0 0.0
    %195 = vmatpush1.msra.mxu0 0.0
    %196 = vmatprep.subr.mxu0 0.0
    %197 = vmatpush1.msra.mxu0 0.0
    %198 = vmatprep.subr.mxu0 0.0
    %199 = vmatpush1.msra.mxu0 0.0
    %200 = vmatprep.subr.mxu0 0.0
    %201 = vmatpush1.msra.mxu0 0.0
    %202 = vmatprep.subr.mxu0 0.0
    %203 = vmatpush1.msra.mxu0 0.0
    %204 = vmatprep.subr.mxu0 0.0
    %205 = vmatpush1.msra.mxu0 0.0
    %206 = vmatprep.subr.mxu0 0.0
    %207 = vmatpush1.msra.mxu0 0.0
    %208 = vmatprep.subr.mxu0 0.0
    %209 = vmatpush1.msra.mxu0 0.0
    %210 = vmatprep.mubr.f32.mxu0 0.0
    %211 = vmatmul.mubr.f32.gmra.mrb[0].mxu0 %v144
    %v212 = vpop.f32.mrb[0].mxu0
    %v213 = vadd.f32 0.0, %v212
    %v214 = vpop.f32.mrb[0].mxu0
    %215 = vdwg.mxu0
    %v216 = vlaneseq
    %v217 = vshrl.u32 %v216, 7
    %vm218 = vcmask 130048
    %v219 = vsel %vm218, %v213, -inf
    %v220 = vrot.slane %v219, 4
    %v221 = vmax.f32 %v219, %v220
    %v222 = vrot.slane %v221, 2
    %v223 = vmax.f32 %v221, %v222
    %v224 = vrot.slane %v223, 1
    %v225 = vmax.f32 %v223, %v224
    %vm226 = vcmp.eq.f32.partialorder %v213, %v225
    %v227 = vsel %vm226, %v217, 8
    %v228 = vsel %vm218, %v227, 2147483647
    %v229 = vrot.slane %v228, 4
    %vm230 = vcmp.lt.s32.totalorder %v228, %v229
    %v231 = vsel %vm230, %v228, %v229
    %v232 = vrot.slane %v231, 2
    %vm233 = vcmp.lt.s32.totalorder %v231, %v232
    %v234 = vsel %vm233, %v231, %v232
    %v235 = vrot.slane %v234, 1
    %vm236 = vcmp.lt.s32.totalorder %v234, %v235
    %v237 = vsel %vm236, %v234, %v235
    %vm238 = vcmp.eq.s32.totalorder %v217, %v237
    %v239 = vsel %vm238, -inf, %v213
    %v240 = vsel %vm218, %v239, -inf
    %v241 = vrot.slane %v240, 4
    %v242 = vmax.f32 %v240, %v241
    %v243 = vrot.slane %v242, 2
    %v244 = vmax.f32 %v242, %v243
    %v245 = vrot.slane %v244, 1
    %v246 = vmax.f32 %v244, %v245
    %vm247 = vcmp.eq.f32.partialorder %v239, %v246
    %v248 = vsel %vm247, %v217, 8
    %v249 = vsel %vm218, %v248, 2147483647
    %v250 = vrot.slane %v249, 4
    %vm251 = vcmp.lt.s32.totalorder %v249, %v250
    %v252 = vsel %vm251, %v249, %v250
    %v253 = vrot.slane %v252, 2
    %vm254 = vcmp.lt.s32.totalorder %v252, %v253
    %v255 = vsel %vm254, %v252, %v253
    %v256 = vrot.slane %v255, 1
    %vm257 = vcmp.lt.s32.totalorder %v255, %v256
    %v258 = vsel %vm257, %v255, %v256
    %v259 = vsub.f32 %v225, %v225
    %v260 = vmul.f32 %v259, 1.442695
    %v261 = vpow.pop %v260
    %v262 = vsub.f32 %v246, %v225
    %v263 = vmul.f32 %v262, 1.442695
    %v264 = vpow.pop %v263
    %v265 = vadd.f32 %v261, %v264
    %v266 = vrcp.pop %v265
    %v267 = vmul.f32 %v261, %v266
    %v268 = vmul.f32 %v264, %v266
    %vm269 = vcmp.eq.s32.totalorder %v217, 0
    %v270 = vsel %vm269, %v267, 0.0
    %v271 = vsel %vm269, %v237, 0
    %vm272 = vcmp.eq.s32.totalorder %v217, 1
    %v273 = vsel %vm272, %v268, %v270
    %v274 = vsel %vm272, %v258, %v271
    %vm275 = vcmask 123904
    %276 = vst.msk [vmem:[#allocation8] sm:$0x3] %vm275, %v273
    %277 = vst.msk [vmem:[#allocation9] sm:$0x3] %vm275, %v274
    %v278 = vsel %vm238, %v267, 0.0
    %v279 = vadd.f32 %v278, 0.0
    %vm280 = vcmp.eq.s32.totalorder %v217, %v258
    %v281 = vsel %vm280, %v268, 0.0
    %v282 = vadd.f32 %v279, %v281
    %v283 = vlaneseq
    %v284 = vand.u32 %v283, 127
    %s285 = smul.u32 0, 16
    %s286 = ssub.s32 16, %s285
    %v287 = vstv %s286
    %vm288 = vcmp.lt.s32.totalorder %v284, %v287
    %v289 = vsel %vm288, 1, 0
    %vm290 = vcmp.eq.s32.totalorder %v289, 1
    %v291 = vsel %vm290, %v282, 0.0
    %v292 = vsel %vm218, %v291, 0.0
    %293 = vadd.xlane.f32.xlu0 %v292
    %v294 = vpop.xlane.xlu0 %293
    %vm295 = vcmask 7168
    %296 = vst.msk [vmem:[%s5] sm:$0xff] %vm295, %v294
    %vm297 = vcmp.gt.f32.partialorder %v291, 0.0
    %v298 = vsel %vm297, 1, 0
    %v299 = vcvt.s32.f32 %v298
    %v300 = vsel %vm218, %v299, 0.0
    %301 = vadd.xlane.f32.xlu0 %v300
    %v302 = vpop.xlane.xlu0 %301
    %303 = vst.msk [vmem:[%s6] sm:$0xff] %vm295, %v302
    // Predicated region
    $region26: #{tpu_custom_call.1} parent=1 // pred_check
      _
    $region27: #{tpu_custom_call.1} parent=1 // pred_check_branch
      %305 = sbr.rel (0) target = $region29
    $region28: #{tpu_custom_call.1} parent=1 // pred_region
      %s307 = ssub.s32 32, 32
      %308 = vsyncadd [#allocation4], %s307
      %s310 = sshll.u32 [#allocation8], 4
      %s311 = int_to_ptr.vmem [resolvable:$true] %s310
      %313 = dma.vmem_to_hbm [thread:$0]  %s311, 32, %s3, [#allocation4]
    $region29: #{tpu_custom_call.1} parent=1 // pred_fallthru
      _
    // Predicated region
    $region30: #{tpu_custom_call.1} parent=1 // pred_check
      _
    $region31: #{tpu_custom_call.1} parent=1 // pred_check_branch
      %315 = sbr.rel (0) target = $region33
    $region32: #{tpu_custom_call.1} parent=1 // pred_region
      %s317 = ssub.s32 32, 32
      %318 = vsyncadd [#allocation10], %s317
      %s320 = sshll.u32 [#allocation9], 4
      %s321 = int_to_ptr.vmem [resolvable:$true] %s320
      %323 = dma.vmem_to_hbm [thread:$0]  %s321, 32, %s4, [#allocation10]
    $region33: #{tpu_custom_call.1} parent=1 // pred_fallthru
      _
    // Predicated region
    $region34: #{tpu_custom_call.1} parent=1 // pred_check
      _
    $region35: #{tpu_custom_call.1} parent=1 // pred_check_branch
      %325 = sbr.rel (0) target = $region37
    $region36: #{tpu_custom_call.1} parent=1 // pred_region
      _
    $region37: #{tpu_custom_call.1} parent=1 // pred_fallthru
      _
    // Predicated region
    $region38: #{tpu_custom_call.1} parent=1 // pred_check
      _
    $region39: #{tpu_custom_call.1} parent=1 // pred_check_branch
      %327 = sbr.rel (0) target = $region41
    $region40: #{tpu_custom_call.1} parent=1 // pred_region
      _
    $region41: #{tpu_custom_call.1} parent=1 // pred_fallthru
      _
    // Predicated region
    $region42: #{tpu_custom_call.1} parent=1 // pred_check
      _
    $region43: #{tpu_custom_call.1} parent=1 // pred_check_branch
      %329 = sbr.rel (0) target = $region45
    $region44: #{tpu_custom_call.1} parent=1 // pred_region
      %330 = dma.done [#allocation4], 32
    $region45: #{tpu_custom_call.1} parent=1 // pred_fallthru
      _
    // Predicated region
    $region46: #{tpu_custom_call.1} parent=1 // pred_check
      _
    $region47: #{tpu_custom_call.1} parent=1 // pred_check_branch
      %332 = sbr.rel (0) target = $region49
    $region48: #{tpu_custom_call.1} parent=1 // pred_region
      %333 = dma.done [#allocation10], 32
    $region49: #{tpu_custom_call.1} parent=1 // pred_fallthru
      _
    // Predicated region
    $region50: #{tpu_custom_call.1} parent=1 // pred_check
      _
    $region51: #{tpu_custom_call.1} parent=1 // pred_check_branch
      %335 = sbr.rel (0) target = $region53
    $region52: #{tpu_custom_call.1} parent=1 // pred_region
      _
    $region53: #{tpu_custom_call.1} parent=1 // pred_fallthru
      _
    // Predicated region
    $region54: #{tpu_custom_call.1} parent=1 // pred_check
      _
    $region55: #{tpu_custom_call.1} parent=1 // pred_check_branch
      %337 = sbr.rel (0) target = $region57
    $region56: #{tpu_custom_call.1} parent=1 // pred_region
      _
    $region57: #{tpu_custom_call.1} parent=1 // pred_fallthru
      _
    %338 = vsyncpa [#allocation3], 1
    %339 = vsyncpa [#allocation6], 1
    %340 = vsyncpa [#allocation4], 1
    %341 = vsyncpa [#allocation10], 1

</llo_original>
